<compile_context>
chip_gen: v6e
topology: v6e:2x2x1
jax: 0.10.0
libtpu: 0.0.40
codegen_flags: <defaults>
</compile_context>

<pallas_src>
import math

import jax
import jax.numpy as jnp
from jax import lax
from jax.experimental import pallas as pl
from jax.experimental.pallas import tpu as pltpu


def _cdiv(a, b):
    return -(-a // b)


def _vmem_capacity_bytes():
    try:
        return int(pltpu.get_tpu_info().vmem_capacity_bytes)
    except Exception:
        return 64 * 1024 * 1024           # conservative (v7x-sized) fallback


# ---------------------------------------------------------------------------
# Kernel: lane-wise sum-of-squares accumulation over row chunks of one split.
#   x_ref, xh_ref : (b_blk, r_blk, 128)   input tile (split dim squeezed)
#   pow_ref, err  : (b_blk, 128) f32      resident output accumulators
# ---------------------------------------------------------------------------
def _make_nmse_kernel(R_s, r_blk):
    ragged = (R_s % r_blk) != 0

    def kernel(x_ref, xh_ref, pow_ref, err_ref):
        ri = pl.program_id(2)

        @pl.when(ri == 0)
        def _init():
            pow_ref[...] = jnp.zeros_like(pow_ref)
            err_ref[...] = jnp.zeros_like(err_ref)

        def accumulate(mask_tail):
            x = x_ref[...].astype(jnp.float32)          # (b_blk, r_blk, 128)
            xh = xh_ref[...].astype(jnp.float32)
            if mask_tail:
                rows = ri * r_blk + lax.broadcasted_iota(jnp.int32, x.shape, 1)
                valid = rows < R_s
                x = jnp.where(valid, x, 0.0)
                xh = jnp.where(valid, xh, 0.0)
            pow_ref[...] += jnp.sum(x * x, axis=1)      # (b_blk, 128)
            d = x - xh
            err_ref[...] += jnp.sum(d * d, axis=1)

        if ragged:
            # Pay the iota/compare/select cost only on the final chunk.
            last = pl.num_programs(2) - 1

            @pl.when(ri < last)
            def _body():
                accumulate(False)

            @pl.when(ri == last)
            def _tail():
                accumulate(True)
        else:
            accumulate(False)

    return kernel


# ---------------------------------------------------------------------------
# Wrapper
# ---------------------------------------------------------------------------
def nmse_loss(x, x_hat, *, vmem_block_bytes=None, vmem_limit_bytes=None):
    """Pallas NMSE loss.  x, x_hat: same shape; first dim is the batch."""
    assert x.shape == x_hat.shape, "x and x_hat must have the same shape"
    B = x.shape[0]
    F = math.prod(x.shape[1:]) if x.ndim > 1 else 1
    xf = x.reshape(B, F)
    xhf = x_hat.reshape(B, F)

    itemsize = jnp.dtype(x.dtype).itemsize

    # ---- generation-aware VMEM budgeting -----------------------------------
    vmem_cap = _vmem_capacity_bytes()
    if vmem_block_bytes is None:
        # 2 inputs x 2 pipeline buffers resident (~4x block); keep that under
        # ~62% of physical VMEM, capped at 16 MiB/block (past ~86% of the HBM
        # roofline bigger blocks stop paying).  v7x(64MiB)->~10MiB, v6e->16MiB.
        vmem_block_bytes = min(16 * 1024 * 1024, (vmem_cap * 5 // 8) // 4)
    if vmem_limit_bytes is None:
        vmem_limit_bytes = min(vmem_cap - 4 * 1024 * 1024,
                               4 * vmem_block_bytes + 8 * 1024 * 1024)

    F_main = (F // 128) * 128        # lane-aligned prefix handled by the kernel
    F_tail = F - F_main

    if F_main > 0:
        R = F_main // 128
        sub = max(8, 32 // itemsize)         # sublane multiple: f32->8, bf16->16

        # Reduction split: give the second TensorCore (v7x megacore) work when
        # the batch axis yields a single tile but the per-sample reduction is
        # long enough to be worth splitting.
        n_s = 2 if (B <= 8 and R % 2 == 0 and R >= 2 * sub) else 1
        R_s = R // n_s

        # Batch tile.
        if B <= 8:
            b_blk = B
        else:
            b_blk = 8
            row_bytes = R_s * 128 * itemsize
            if B >= 32 and 8 * row_bytes < vmem_block_bytes:
                # Per-sample data is small: grow the batch tile toward the
                # block budget but keep >= 2 tiles on the 'parallel' axis.
                grow = min(vmem_block_bytes // max(1, row_bytes), B // 2)
                b_blk = max(8, (grow // 8) * 8)
        n_b = _cdiv(B, b_blk)
        Bp = n_b * b_blk                 # padded batch; ragged last tile needs
                                         # no mask — padded rows are sliced off.

        # Row chunk: ~vmem_block_bytes per input block, sublane-aligned.
        r_target = max(sub, vmem_block_bytes // max(1, b_blk * 128 * itemsize))
        if R_s <= r_target:
            r_blk = R_s                  # single chunk, no ragged tail
        else:
            r_blk = max(sub, (r_target // sub) * sub)
        n_r = _cdiv(R_s, r_blk)

        if F_tail == 0:
            xd = x.reshape(B, n_s, R_s, 128)         # row-major reshape: free
            xhd = x_hat.reshape(B, n_s, R_s, 128)
        else:
            # TODO(synk): this prefix slice is materialized by XLA before the
            # kernel (one extra pass over these bytes); a manual-DMA (pl.ANY)
            # path would avoid it for lane-unaligned F.
            xd = xf[:, :F_main].reshape(B, n_s, R_s, 128)
            xhd = xhf[:, :F_main].reshape(B, n_s, R_s, 128)

        pow_lanes, err_lanes = pl.pallas_call(
            _make_nmse_kernel(R_s, r_blk),
            out_shape=(jax.ShapeDtypeStruct((n_s, Bp, 128), jnp.float32),
                       jax.ShapeDtypeStruct((n_s, Bp, 128), jnp.float32)),
            grid_spec=pltpu.PrefetchScalarGridSpec(
                num_scalar_prefetch=0,
                grid=(n_b, n_s, n_r),
                in_specs=[
                    pl.BlockSpec((b_blk, None, r_blk, 128),
                                 lambda bi, si, ri: (bi, si, ri, 0)),
                    pl.BlockSpec((b_blk, None, r_blk, 128),
                                 lambda bi, si, ri: (bi, si, ri, 0)),
                ],
                out_specs=[
                    pl.BlockSpec((None, b_blk, 128),
                                 lambda bi, si, ri: (si, bi, 0)),
                    pl.BlockSpec((None, b_blk, 128),
                                 lambda bi, si, ri: (si, bi, 0)),
                ],
            ),
            compiler_params=pltpu.CompilerParams(
                dimension_semantics=("parallel", "parallel", "arbitrary"),
                vmem_limit_bytes=int(vmem_limit_bytes),
            ),
        )(xd, xhd)

        # Single cross-lane + cross-split reduce, once, outside the kernel.
        power = jnp.sum(pow_lanes[:, :B, :], axis=(0, 2))      # (B,)
        err = jnp.sum(err_lanes[:, :B, :], axis=(0, 2))
    else:
        # TODO(synk): F < 128 has no lane-aligned prefix — handled fully by the
        # tiny plain-JAX tail below; too small for a kernel to pay off.
        power = jnp.zeros((B,), jnp.float32)
        err = jnp.zeros((B,), jnp.float32)

    if F_tail > 0:
        # Sub-128-column tail: < B*128*itemsize bytes — negligible; plain JAX.
        xt = xf[:, F_main:].astype(jnp.float32)
        xht = xhf[:, F_main:].astype(jnp.float32)
        power = power + jnp.sum(xt * xt, axis=1)
        dt = xt - xht
        err = err + jnp.sum(dt * dt, axis=1)

    # power == 0 -> inf/nan, exactly like the PyTorch reference.
    return jnp.mean(err / power)


def nmse_loss_ref(x, x_hat):
    B = x.shape[0]
    xf = x.reshape(B, -1).astype(jnp.float32)
    xhf = x_hat.reshape(B, -1).astype(jnp.float32)
    power = jnp.sum(jnp.abs(xf) ** 2, axis=1)
    mse = jnp.sum(jnp.abs(xf - xhf) ** 2, axis=1) / power
    return jnp.mean(mse)


if __name__ == "__main__":
    keys = jax.random.split(jax.random.PRNGKey(0), 12)

    def _check(xx, xxh, rtol=1e-5, atol=1e-6, **kw):
        got = jax.block_until_ready(nmse_loss(xx, xxh, **kw))
        want = jax.block_until_ready(nmse_loss_ref(xx, xxh))
        assert jnp.allclose(got, want, rtol=rtol, atol=atol), (got, want)

    # 1) NCHW f32 — dense path, whole problem in a single block.
    x = jax.random.normal(keys[0], (2, 4, 16, 16), dtype=jnp.float32)
    xh = x + 0.1 * jax.random.normal(keys[1], (2, 4, 16, 16), dtype=jnp.float32)
    _check(x, xh)

    # 2) bf16 inputs stream at half the HBM bytes; f32 accumulation in-kernel.
    _check(x.astype(jnp.bfloat16), xh.astype(jnp.bfloat16), rtol=1e-4, atol=1e-5)

    # 3) Ragged reduction tail: a tiny block budget forces row chunking; the
    #    tail mask is applied only on the last reduction step.
    x3 = jax.random.normal(keys[2], (2, 4, 16, 20), dtype=jnp.float32)   # R=10
    xh3 = x3 + 0.1 * jax.random.normal(keys[3], (2, 4, 16, 20), dtype=jnp.float32)
    _check(x3, xh3, vmem_block_bytes=8 * 1024)

    # 4) F % 128 != 0: lane-aligned prefix through the dense kernel, <128-col
    #    tail in plain JAX.
    x4 = jax.random.normal(keys[4], (2, 3, 10, 10), dtype=jnp.float32)   # F=300
    xh4 = x4 + 0.1 * jax.random.normal(keys[5], (2, 3, 10, 10), dtype=jnp.float32)
    _check(x4, xh4)

    # 5) Ragged batch tile (B=18, b_blk=8): padded rows are sliced off, no mask.
    x5 = jax.random.normal(keys[6], (18, 4, 16, 16), dtype=jnp.float32)
    xh5 = x5 + 0.1 * jax.random.normal(keys[7], (18, 4, 16, 16), dtype=jnp.float32)
    _check(x5, xh5)

    # 6) Small batch + long reduction: reduction-split axis (n_s=2) gives the
    #    second TensorCore half the rows on v7x.
    x6 = jax.random.normal(keys[8], (2, 4, 32, 128), dtype=jnp.float32)
    xh6 = x6 + 0.1 * jax.random.normal(keys[9], (2, 4, 32, 128), dtype=jnp.float32)
    _check(x6, xh6)

    print("KERNEL_OK")
</pallas_src>

<mosaic_0001>
module attributes {stable_mosaic.version = 11 : i64} {
  func.func @kernel(%arg0: i32, %arg1: i32, %arg2: i32, %arg3: memref<2x1x8x128xf32, #tpu.memory_space<vmem>>, %arg4: memref<2x1x8x128xf32, #tpu.memory_space<vmem>>, %arg5: memref<1x2x128xf32, #tpu.memory_space<vmem>>, %arg6: memref<1x2x128xf32, #tpu.memory_space<vmem>>) attributes {dimension_semantics = [#tpu.dimension_semantics<parallel>, #tpu.dimension_semantics<parallel>, #tpu.dimension_semantics<arbitrary>], iteration_bounds = array<i64: 1, 1, 1>, scalar_prefetch = 0 : i64, scratch_operands = 0 : i64, tpu.core_type = #tpu.core_type<tc>, window_params = [{transform_indices = @transform_0, window_bounds = array<i64: 2, 1, 8, 128>}, {transform_indices = @transform_1, window_bounds = array<i64: 2, 1, 8, 128>}, {transform_indices = @transform_2, window_bounds = array<i64: 1, 2, 128>}, {transform_indices = @transform_3, window_bounds = array<i64: 1, 2, 128>}]} {
    %c0_i32 = arith.constant 0 : i32
    %0 = arith.cmpi eq, %arg2, %c0_i32 : i32
    %1 = arith.extui %0 : i1 to i32
    %c0_i32_0 = arith.constant 0 : i32
    %2 = arith.cmpi ne, %1, %c0_i32_0 : i32
    scf.if %2 {
      %cst_21 = arith.constant 0.000000e+00 : f32
      %24 = vector.broadcast %cst_21 : f32 to vector<2x128xf32>
      %c0_22 = arith.constant 0 : index
      %c0_23 = arith.constant 0 : index
      %c0_24 = arith.constant 0 : index
      %25 = vector.load %arg5[%c0_22, %c0_23, %c0_24] : memref<1x2x128xf32, #tpu.memory_space<vmem>>, vector<1x2x128xf32>
      %26 = vector.shape_cast %25 : vector<1x2x128xf32> to vector<2x128xf32>
      %27 = vector.shape_cast %24 : vector<2x128xf32> to vector<1x2x128xf32>
      tpu.vector_store %arg5[%c0_22, %c0_23, %c0_24], %27 {strides = array<i32>} : memref<1x2x128xf32, #tpu.memory_space<vmem>>, vector<1x2x128xf32>,
      %cst_25 = arith.constant 0.000000e+00 : f32
      %28 = vector.broadcast %cst_25 : f32 to vector<2x128xf32>
      %c0_26 = arith.constant 0 : index
      %c0_27 = arith.constant 0 : index
      %c0_28 = arith.constant 0 : index
      %29 = vector.load %arg6[%c0_26, %c0_27, %c0_28] : memref<1x2x128xf32, #tpu.memory_space<vmem>>, vector<1x2x128xf32>
      %30 = vector.shape_cast %29 : vector<1x2x128xf32> to vector<2x128xf32>
      %31 = vector.shape_cast %28 : vector<2x128xf32> to vector<1x2x128xf32>
      tpu.vector_store %arg6[%c0_26, %c0_27, %c0_28], %31 {strides = array<i32>} : memref<1x2x128xf32, #tpu.memory_space<vmem>>, vector<1x2x128xf32>,
    } else {
    }
    %c0 = arith.constant 0 : index
    %c0_1 = arith.constant 0 : index
    %c0_2 = arith.constant 0 : index
    %c0_3 = arith.constant 0 : index
    %3 = vector.load %arg3[%c0, %c0_1, %c0_2, %c0_3] : memref<2x1x8x128xf32, #tpu.memory_space<vmem>>, vector<2x1x8x128xf32>
    %4 = vector.shape_cast %3 : vector<2x1x8x128xf32> to vector<2x8x128xf32>
    %c0_4 = arith.constant 0 : index
    %c0_5 = arith.constant 0 : index
    %c0_6 = arith.constant 0 : index
    %c0_7 = arith.constant 0 : index
    %5 = vector.load %arg4[%c0_4, %c0_5, %c0_6, %c0_7] : memref<2x1x8x128xf32, #tpu.memory_space<vmem>>, vector<2x1x8x128xf32>
    %6 = vector.shape_cast %5 : vector<2x1x8x128xf32> to vector<2x8x128xf32>
    %c0_8 = arith.constant 0 : index
    %c0_9 = arith.constant 0 : index
    %c0_10 = arith.constant 0 : index
    %7 = vector.load %arg5[%c0_8, %c0_9, %c0_10] : memref<1x2x128xf32, #tpu.memory_space<vmem>>, vector<1x2x128xf32>
    %8 = vector.shape_cast %7 : vector<1x2x128xf32> to vector<2x128xf32>
    %9 = arith.mulf %4, %4 : vector<2x8x128xf32>
    %cst = arith.constant dense<0.000000e+00> : vector<2x128xf32>
    %10 = vector.multi_reduction <add>, %9, %cst [1] : vector<2x8x128xf32> to vector<2x128xf32>
    %11 = arith.addf %8, %10 : vector<2x128xf32>
    %c0_11 = arith.constant 0 : index
    %c0_12 = arith.constant 0 : index
    %c0_13 = arith.constant 0 : index
    %12 = vector.load %arg5[%c0_11, %c0_12, %c0_13] : memref<1x2x128xf32, #tpu.memory_space<vmem>>, vector<1x2x128xf32>
    %13 = vector.shape_cast %12 : vector<1x2x128xf32> to vector<2x128xf32>
    %14 = vector.shape_cast %11 : vector<2x128xf32> to vector<1x2x128xf32>
    tpu.vector_store %arg5[%c0_11, %c0_12, %c0_13], %14 {strides = array<i32>} : memref<1x2x128xf32, #tpu.memory_space<vmem>>, vector<1x2x128xf32>,
    %15 = arith.subf %4, %6 : vector<2x8x128xf32>
    %c0_14 = arith.constant 0 : index
    %c0_15 = arith.constant 0 : index
    %c0_16 = arith.constant 0 : index
    %16 = vector.load %arg6[%c0_14, %c0_15, %c0_16] : memref<1x2x128xf32, #tpu.memory_space<vmem>>, vector<1x2x128xf32>
    %17 = vector.shape_cast %16 : vector<1x2x128xf32> to vector<2x128xf32>
    %18 = arith.mulf %15, %15 : vector<2x8x128xf32>
    %cst_17 = arith.constant dense<0.000000e+00> : vector<2x128xf32>
    %19 = vector.multi_reduction <add>, %18, %cst_17 [1] : vector<2x8x128xf32> to vector<2x128xf32>
    %20 = arith.addf %17, %19 : vector<2x128xf32>
    %c0_18 = arith.constant 0 : index
    %c0_19 = arith.constant 0 : index
    %c0_20 = arith.constant 0 : index
    %21 = vector.load %arg6[%c0_18, %c0_19, %c0_20] : memref<1x2x128xf32, #tpu.memory_space<vmem>>, vector<1x2x128xf32>
    %22 = vector.shape_cast %21 : vector<1x2x128xf32> to vector<2x128xf32>
    %23 = vector.shape_cast %20 : vector<2x128xf32> to vector<1x2x128xf32>
    tpu.vector_store %arg6[%c0_18, %c0_19, %c0_20], %23 {strides = array<i32>} : memref<1x2x128xf32, #tpu.memory_space<vmem>>, vector<1x2x128xf32>,
    return
  }
  func.func @transform_0(%arg0: i32, %arg1: i32, %arg2: i32) -> (i32, i32, i32, i32) {
    %c0_i32 = arith.constant 0 : i32
    %c0_i32_0 = arith.constant 0 : i32
    return %arg0, %arg1, %arg2, %c0_i32 : i32, i32, i32, i32
  }
  func.func @transform_1(%arg0: i32, %arg1: i32, %arg2: i32) -> (i32, i32, i32, i32) {
    %c0_i32 = arith.constant 0 : i32
    %c0_i32_0 = arith.constant 0 : i32
    return %arg0, %arg1, %arg2, %c0_i32 : i32, i32, i32, i32
  }
  func.func @transform_2(%arg0: i32, %arg1: i32, %arg2: i32) -> (i32, i32, i32) {
    %c0_i32 = arith.constant 0 : i32
    %c0_i32_0 = arith.constant 0 : i32
    return %arg1, %arg0, %c0_i32 : i32, i32, i32
  }
  func.func @transform_3(%arg0: i32, %arg1: i32, %arg2: i32) -> (i32, i32, i32) {
    %c0_i32 = arith.constant 0 : i32
    %c0_i32_0 = arith.constant 0 : i32
    return %arg1, %arg0, %c0_i32 : i32, i32, i32
  }
}

</mosaic_0001>

<llo_original>
// kernel: tpu_custom_call.1
$region0: #{tpu_custom_call.1}
  #allocation0 [shape = 'u32[]', space=smem, size = 0x4, offset = 0x4, fixed_abs, tag = 'smem constant byte address 0x4 - core index']
  #allocation1 [shape = 'u32[144,128]{1,0:T(1,128)}', space=vmem, size = 0x12000, scoped, tag = 'internal scratch']
  %s0 = inlined_call_operand.hbm [shape: f32[2,1,8,128], index: 0, kind: input, shape index: {}]
  %s1 = inlined_call_operand.hbm [shape: f32[2,1,8,128], index: 1, kind: input, shape index: {}]
  %s2 = inlined_call_operand.hbm [shape: f32[1,2,128], index: 2, kind: output, shape index: {0}]
  %s3 = inlined_call_operand.hbm [shape: f32[1,2,128], index: 3, kind: output, shape index: {1}]
  %4 = xla_tuple %s2, %s3
  %s5 = sld [smem:[#allocation0]]
  $region38: #{tpu_custom_call.1} parent=0
    _
  %s7 = ssub.s32 1, %s5
  %s8 = scalar_select 0, %s7, %s5
  $region1: #{tpu_custom_call.1} parent=0
    #allocation2 [shape = 'u8[8192]{0}', space=vmem, size = 0x2000, scoped, tag = 'input window, operand 0, single buffered']
    #allocation3 [shape = 's32[1]{0}', space=sflag, size = 0x4, scoped, tag = 'scoped memory for tpu_custom_call.1']
    #allocation4 [shape = 's32[1]{0}', space=sflag, size = 0x4, scoped, tag = 'scoped memory for tpu_custom_call.1']
    #allocation5 [shape = 'u8[8192]{0}', space=vmem, size = 0x2000, scoped, tag = 'input window, operand 1, single buffered']
    #allocation6 [shape = 's32[1]{0}', space=sflag, size = 0x4, scoped, tag = 'scoped memory for tpu_custom_call.1']
    #allocation7 [shape = 'u8[1024]{0}', space=vmem, size = 0x400, scoped, tag = 'output window, operand 0, single buffered']
    #allocation8 [shape = 'u8[1024]{0}', space=vmem, size = 0x400, scoped, tag = 'output window, operand 1, single buffered']
    #allocation9 [shape = 's32[1]{0}', space=sflag, size = 0x4, scoped, tag = 'scoped memory for tpu_custom_call.1']
    %9 = vsyncpa [#allocation3], 0
    %10 = vsyncpa [#allocation6], 0
    %11 = vsyncpa [#allocation4], 0
    %12 = vsyncpa [#allocation9], 0
    // Predicated region
    $region2: #{tpu_custom_call.1} parent=1 // pred_check
      _
    $region3: #{tpu_custom_call.1} parent=1 // pred_check_branch
      %14 = sbr.rel (0) target = $region5
    $region4: #{tpu_custom_call.1} parent=1 // pred_region
      %s16 = ssub.s32 256, 256
      %17 = vsyncadd [#allocation3], %s16
      %s18 = sshll.u32 [#allocation2], 4
      %s19 = int_to_ptr.vmem [resolvable:$true] %s18
      %24 = dma.hbm_to_vmem [thread:$0]  %s0, 256, %s19, [#allocation3], 128, 128, 8
    $region5: #{tpu_custom_call.1} parent=1 // pred_fallthru
      _
    // Predicated region
    $region6: #{tpu_custom_call.1} parent=1 // pred_check
      _
    $region7: #{tpu_custom_call.1} parent=1 // pred_check_branch
      %26 = sbr.rel (0) target = $region9
    $region8: #{tpu_custom_call.1} parent=1 // pred_region
      %s28 = ssub.s32 256, 256
      %29 = vsyncadd [#allocation6], %s28
      %s30 = sshll.u32 [#allocation5], 4
      %s31 = int_to_ptr.vmem [resolvable:$true] %s30
      %36 = dma.hbm_to_vmem [thread:$0]  %s1, 256, %s31, [#allocation6], 128, 128, 8
    $region9: #{tpu_custom_call.1} parent=1 // pred_fallthru
      _
    // Predicated region
    $region10: #{tpu_custom_call.1} parent=1 // pred_check
      _
    $region11: #{tpu_custom_call.1} parent=1 // pred_check_branch
      %38 = sbr.rel (0) target = $region13
    $region12: #{tpu_custom_call.1} parent=1 // pred_region
      %39 = dma.done [#allocation3], 256
    $region13: #{tpu_custom_call.1} parent=1 // pred_fallthru
      _
    // Predicated region
    $region14: #{tpu_custom_call.1} parent=1 // pred_check
      _
    $region15: #{tpu_custom_call.1} parent=1 // pred_check_branch
      %41 = sbr.rel (0) target = $region17
    $region16: #{tpu_custom_call.1} parent=1 // pred_region
      %42 = dma.done [#allocation6], 256
    $region17: #{tpu_custom_call.1} parent=1 // pred_fallthru
      _
    %p43 = scmp.eq.s32.totalorder 0, 0
    // Predicated region
    $region18: #{tpu_custom_call.1} parent=1 // pred_check
      %p44 = pneg %p43
    $region19: #{tpu_custom_call.1} parent=1 // pred_check_branch
      %46 = sbr.rel (%p44) target = $region21
    $region20: #{tpu_custom_call.1} parent=1 // pred_region
      %47 = vst [vmem:[#allocation7] sm:$0x3] 0.0
      %48 = vst [vmem:[#allocation8] sm:$0x3] 0.0
    $region21: #{tpu_custom_call.1} parent=1 // pred_fallthru
      _
    %v49 = vld [vmem:[#allocation2] sm:$0xff]
    %v50 = vld [vmem:[#allocation2 + $0x8] sm:$0xff]
    %v51 = vld [vmem:[#allocation5] sm:$0xff]
    %v52 = vld [vmem:[#allocation5 + $0x8] sm:$0xff]
    %v53 = vld [vmem:[#allocation7] sm:$0x3]
    %v54 = vmul.f32 %v49, %v49
    %v55 = vmul.f32 %v50, %v50
    %v56 = vrot.slane %v54, 4
    %v57 = vadd.f32 %v54, %v56
    %v58 = vrot.slane %v57, 2
    %v59 = vadd.f32 %v57, %v58
    %v60 = vrot.slane %v59, 1
    %v61 = vadd.f32 %v59, %v60
    %v62 = vrot.slane %v55, 4
    %v63 = vadd.f32 %v55, %v62
    %v64 = vrot.slane %v63, 2
    %v65 = vadd.f32 %v63, %v64
    %v66 = vrot.slane %v65, 1
    %v67 = vadd.f32 %v65, %v66
    %vm70 = vcmask 1041409
    %v71 = vsel %vm70, %v67, %v61
    %v73 = vadd.f32 %v53, %v71
    %74 = vst [vmem:[#allocation7] sm:$0x3] %v73
    %v75 = vsub.f32 %v49, %v51
    %v76 = vsub.f32 %v50, %v52
    %v77 = vld [vmem:[#allocation8] sm:$0x3]
    %v78 = vmul.f32 %v75, %v75
    %v79 = vmul.f32 %v76, %v76
    %v80 = vrot.slane %v78, 4
    %v81 = vadd.f32 %v78, %v80
    %v82 = vrot.slane %v81, 2
    %v83 = vadd.f32 %v81, %v82
    %v84 = vrot.slane %v83, 1
    %v85 = vadd.f32 %v83, %v84
    %v86 = vrot.slane %v79, 4
    %v87 = vadd.f32 %v79, %v86
    %v88 = vrot.slane %v87, 2
    %v89 = vadd.f32 %v87, %v88
    %v90 = vrot.slane %v89, 1
    %v91 = vadd.f32 %v89, %v90
    %v94 = vsel %vm70, %v91, %v85
    %v96 = vadd.f32 %v77, %v94
    %97 = vst [vmem:[#allocation8] sm:$0x3] %v96
    // Predicated region
    $region22: #{tpu_custom_call.1} parent=1 // pred_check
      _
    $region23: #{tpu_custom_call.1} parent=1 // pred_check_branch
      %99 = sbr.rel (0) target = $region25
    $region24: #{tpu_custom_call.1} parent=1 // pred_region
      %s101 = ssub.s32 32, 32
      %102 = vsyncadd [#allocation4], %s101
      %s104 = sshll.u32 [#allocation7], 4
      %s105 = int_to_ptr.vmem [resolvable:$true] %s104
      %107 = dma.vmem_to_hbm [thread:$0]  %s105, 32, %s2, [#allocation4]
    $region25: #{tpu_custom_call.1} parent=1 // pred_fallthru
      _
    // Predicated region
    $region26: #{tpu_custom_call.1} parent=1 // pred_check
      _
    $region27: #{tpu_custom_call.1} parent=1 // pred_check_branch
      %109 = sbr.rel (0) target = $region29
    $region28: #{tpu_custom_call.1} parent=1 // pred_region
      %s111 = ssub.s32 32, 32
      %112 = vsyncadd [#allocation9], %s111
      %s114 = sshll.u32 [#allocation8], 4
      %s115 = int_to_ptr.vmem [resolvable:$true] %s114
      %117 = dma.vmem_to_hbm [thread:$0]  %s115, 32, %s3, [#allocation9]
    $region29: #{tpu_custom_call.1} parent=1 // pred_fallthru
      _
    // Predicated region
    $region30: #{tpu_custom_call.1} parent=1 // pred_check
      _
    $region31: #{tpu_custom_call.1} parent=1 // pred_check_branch
      %119 = sbr.rel (0) target = $region33
    $region32: #{tpu_custom_call.1} parent=1 // pred_region
      %120 = dma.done [#allocation4], 32
    $region33: #{tpu_custom_call.1} parent=1 // pred_fallthru
      _
    // Predicated region
    $region34: #{tpu_custom_call.1} parent=1 // pred_check
      _
    $region35: #{tpu_custom_call.1} parent=1 // pred_check_branch
      %122 = sbr.rel (0) target = $region37
    $region36: #{tpu_custom_call.1} parent=1 // pred_region
      %123 = dma.done [#allocation9], 32
    $region37: #{tpu_custom_call.1} parent=1 // pred_fallthru
      _
    %124 = vsyncpa [#allocation3], 1
    %125 = vsyncpa [#allocation6], 1
    %126 = vsyncpa [#allocation4], 1
    %127 = vsyncpa [#allocation9], 1

</llo_original>
